<compile_context>
chip_gen: v6e
topology: v6e:2x2x1
jax: 0.10.0
libtpu: 0.0.40
codegen_flags: <defaults>
</compile_context>

<pallas_src>
import math

import jax
import jax.numpy as jnp
from jax.experimental import pallas as pl
from jax.experimental.pallas import tpu as pltpu

BETA_LS = 0.4                 # softplus beta applied to the lengthscale parameter
SMALL_N = 1 << 14             # below this, plain XLA fusion beats kernel launch cost
TARGET_BLOCK_BYTES = 4 << 20  # ~4 MiB input block -> ~16 MiB VMEM double-buffered
VMEM_BUDGET_BYTES = 24 << 20  # stay inside the 32 MiB default scoped limit (v7x-safe)
MIN_GRID_STEPS = 8            # keep enough steps for the v7x 2-TC megacore split


def _softplus(x, beta):
    # Matches torch.nn.functional.softplus(x, beta, threshold=20):
    # linear when beta*x > 20, else log1p(exp(beta*x)) / beta
    bx = beta * x
    return jnp.where(bx > 20.0, x, jnp.log1p(jnp.exp(bx)) / beta)


def _kernel_alpha1(params_ref, d_ref, o_ref):
    # params_ref (SMEM): [inv_lengthscale, c]  with c = sigmoid(sigma) * alpha
    inv_ls = params_ref[0]
    c = params_ref[1]
    d = d_ref[...].astype(jnp.float32)                 # cast in-register
    decay = jnp.exp(-d * inv_ls)                       # exp(-d / lengthscale)
    gate = jax.nn.sigmoid(d)                           # (1 + exp(-d))^{-1}, single EUP push
    o_ref[...] = (c * decay * gate).astype(o_ref.dtype)


def _kernel_general(params_ref, d_ref, o_ref):
    # params_ref (SMEM): [inv_lengthscale, c, alpha]
    inv_ls = params_ref[0]
    c = params_ref[1]
    alpha = params_ref[2]
    d = d_ref[...].astype(jnp.float32)
    # (1+exp(-d))^(-alpha) = exp(-alpha * softplus(-d)); stable softplus, fused exp.
    sp = jnp.maximum(-d, 0.0) + jnp.log1p(jnp.exp(-jnp.abs(d)))
    o_ref[...] = (c * jnp.exp(-d * inv_ls - alpha * sp)).astype(o_ref.dtype)


def _xla_forward(time_diff, inv_ls, c, alpha_f, out_dtype):
    # Small-input / fallback path: a short elementwise chain is optimal in XLA.
    d = time_diff.astype(jnp.float32)
    sp = jnp.maximum(-d, 0.0) + jnp.log1p(jnp.exp(-jnp.abs(d)))
    return (c * jnp.exp(-d * inv_ls - alpha_f * sp)).astype(out_dtype)


def magic_kernel_forward(time_diff, lengthscale_param, sigma_param, alpha=1.0,
                         *, min_pallas_elems=SMALL_N, max_block_rows=None):
    """Pallas TPU implementation of multiplication_kernel.forward (num_types=1)."""
    orig_shape = time_diff.shape
    orig_dtype = time_diff.dtype
    n = math.prod(orig_shape) if orig_shape else 1
    if n == 0:
        return time_diff

    # Scalar pre-compute (a handful of scalar ops, not per-element work).
    lengthscale = _softplus(jnp.asarray(lengthscale_param, jnp.float32), BETA_LS)
    sigma = jax.nn.sigmoid(jnp.asarray(sigma_param, jnp.float32))
    alpha_is_one = isinstance(alpha, (int, float)) and float(alpha) == 1.0
    alpha_f = jnp.asarray(alpha, jnp.float32)
    inv_ls = 1.0 / lengthscale
    c = sigma * alpha_f

    if n < min_pallas_elems or time_diff.ndim == 0:
        return _xla_forward(time_diff, inv_ls, c, alpha_f, orig_dtype)

    # Keep the array in its ORIGINAL layout: tile the second-to-last dim, keep the
    # last dim whole, turn each leading dim into a grid axis.  No pad, no reshape,
    # no output slice -> exactly 1 HBM read + 1 HBM write.
    x = time_diff
    squeeze_back = False
    if x.ndim == 1:
        x = x[None, :]                 # unit leading dim; layout-compatible view
        squeeze_back = True

    lead = x.shape[:-2]
    R, C = x.shape[-2], x.shape[-1]
    itemsize = jnp.dtype(orig_dtype).itemsize
    prod_lead = math.prod(lead) if lead else 1

    # Degenerate mega-wide rows: even an 8-row block would blow the VMEM budget.
    if 4 * 8 * C * itemsize > VMEM_BUDGET_BYTES:
        # TODO(synk): add lane (last-dim) tiling for C % 128 == 0 mega-wide inputs.
        return _xla_forward(time_diff, inv_ls, c, alpha_f, orig_dtype)

    # Pick the row-block size: ~4 MiB of input per block, multiple of 8 rows,
    # but keep the total grid length >= MIN_GRID_STEPS for megacore balance.
    if R <= 8:
        blk_r = R                                  # full-dim block (always legal)
    else:
        blk_r = max(8, (TARGET_BLOCK_BYTES // (C * itemsize)) // 8 * 8)
        want_row_tiles = max(1, -(-MIN_GRID_STEPS // prod_lead))   # ceil
        if want_row_tiles > 1:
            per = -(-R // want_row_tiles)          # ceil(R / want_row_tiles)
            per = -(-per // 8) * 8                 # round up to multiple of 8
            blk_r = min(blk_r, per)
        if max_block_rows is not None:
            blk_r = min(blk_r, max(8, (int(max_block_rows) // 8) * 8))
        if blk_r >= R:
            blk_r = R                              # full dim: always a legal block

    n_row_tiles = pl.cdiv(R, blk_r)
    grid = tuple(lead) + (n_row_tiles,)
    block_shape = (1,) * len(lead) + (blk_r, C)

    def idx_map(*idx):                             # (*lead_idx, row_tile) -> block idx
        return idx + (0,)

    if alpha_is_one:
        kernel = _kernel_alpha1
        params = jnp.stack([inv_ls, c]).astype(jnp.float32)
        transcendentals = 2 * n                    # exp + sigmoid per element
    else:
        kernel = _kernel_general
        params = jnp.stack([inv_ls, c, alpha_f]).astype(jnp.float32)
        transcendentals = 3 * n                    # exp + log1p + exp per element

    out = pl.pallas_call(
        kernel,
        out_shape=jax.ShapeDtypeStruct(x.shape, orig_dtype),
        grid=grid,
        in_specs=[
            pl.BlockSpec(memory_space=pltpu.MemorySpace.SMEM),   # scalar params
            pl.BlockSpec(block_shape, idx_map),                  # row tiles, in-place layout
        ],
        out_specs=pl.BlockSpec(block_shape, idx_map),
        compiler_params=pltpu.CompilerParams(
            dimension_semantics=("parallel",) * len(grid)),
        cost_estimate=pl.CostEstimate(
            flops=5 * n,
            transcendentals=transcendentals,
            bytes_accessed=2 * n * itemsize + int(params.size) * 4),
    )(params, x)

    if squeeze_back:
        out = out[0]
    return out


def _reference(time_diff, lengthscale_param, sigma_param, alpha=1.0):
    lengthscale = _softplus(jnp.asarray(lengthscale_param, jnp.float32), BETA_LS)
    sigma = jax.nn.sigmoid(jnp.asarray(sigma_param, jnp.float32))
    d = time_diff.astype(jnp.float32)
    out = sigma * alpha * jnp.exp(-d / lengthscale) * (1.0 + jnp.exp(-d)) ** (-alpha)
    return out.astype(time_diff.dtype)


if __name__ == "__main__":
    key = jax.random.PRNGKey(0)
    k_ls, k_sig, k_s, k_d1, k_d2, k_d3 = jax.random.split(key, 6)

    # Deterministic parameter init mirroring torch.randn(1) shapes.
    lengthscale_param = jax.random.normal(k_ls, ())      # self.lengthscale
    sigma_param = jax.random.normal(k_sig, ())           # self.sigma
    _s_param = jax.random.normal(k_s, ())                # self.s (unused in forward)
    alpha = 1.0                                          # self.alpha

    # (a) tiny pairwise tensor (2,8,8) -> small-input XLA fast path.
    td_small = jnp.abs(jax.random.normal(k_d1, (2, 8, 8), dtype=jnp.float32))
    out_small = jax.block_until_ready(
        magic_kernel_forward(td_small, lengthscale_param, sigma_param, alpha))
    ref_small = _reference(td_small, lengthscale_param, sigma_param, alpha)
    assert out_small.shape == td_small.shape
    assert jnp.allclose(out_small, ref_small, atol=1e-5, rtol=1e-5), "fast path mismatch"

    # (b) ragged pairwise tensor -> Pallas path: multi-tile grid (2x4 steps),
    #     partial edge block, no wrapper-side pad / reshape / output slice.
    td = jnp.abs(jax.random.normal(k_d2, (2, 127, 100), dtype=jnp.float32))
    out = jax.block_until_ready(
        magic_kernel_forward(td, lengthscale_param, sigma_param, alpha,
                             min_pallas_elems=0))
    ref = _reference(td, lengthscale_param, sigma_param, alpha)
    assert out.shape == td.shape
    assert jnp.allclose(out, ref, atol=1e-5, rtol=1e-5), "alpha==1 kernel mismatch"

    # (c) general-alpha kernel (fused-exp pow rewrite), short second-to-last dim.
    td3 = jnp.abs(jax.random.normal(k_d3, (3, 5, 40), dtype=jnp.float32))
    out_g = jax.block_until_ready(
        magic_kernel_forward(td3, lengthscale_param, sigma_param, 1.7,
                             min_pallas_elems=0))
    ref_g = _reference(td3, lengthscale_param, sigma_param, 1.7)
    assert out_g.shape == td3.shape
    assert jnp.allclose(out_g, ref_g, atol=1e-5, rtol=1e-5), "general kernel mismatch"

    print("KERNEL_OK")
</pallas_src>

<mosaic_0001>
module attributes {stable_mosaic.version = 11 : i64} {
  func.func @_kernel_alpha1(%arg0: i32, %arg1: i32, %arg2: memref<2xf32, #tpu.memory_space<smem>>, %arg3: memref<1x32x100xf32, #tpu.memory_space<vmem>>, %arg4: memref<1x32x100xf32, #tpu.memory_space<vmem>>) attributes {dimension_semantics = [#tpu.dimension_semantics<parallel>, #tpu.dimension_semantics<parallel>], iteration_bounds = array<i64: 2, 4>, scalar_prefetch = 0 : i64, scratch_operands = 0 : i64, tpu.core_type = #tpu.core_type<tc>, window_params = [{transform_indices = @transform_0, window_bounds = array<i64: 2>}, {transform_indices = @transform_1, window_bounds = array<i64: 1, 32, 100>}, {transform_indices = @transform_2, window_bounds = array<i64: 1, 32, 100>}]} {
    %c0 = arith.constant 0 : index
    %0 = memref.load %arg2[%c0] : memref<2xf32, #tpu.memory_space<smem>>
    %c1 = arith.constant 1 : index
    %1 = memref.load %arg2[%c1] : memref<2xf32, #tpu.memory_space<smem>>
    %c0_0 = arith.constant 0 : index
    %c0_1 = arith.constant 0 : index
    %c0_2 = arith.constant 0 : index
    %2 = vector.load %arg3[%c0_0, %c0_1, %c0_2] : memref<1x32x100xf32, #tpu.memory_space<vmem>>, vector<1x32x100xf32>
    %cst = arith.constant 0.000000e+00 : f32
    %3 = vector.broadcast %cst : f32 to vector<1x32x100xf32>
    %4 = arith.subf %3, %2 : vector<1x32x100xf32>
    %5 = vector.broadcast %0 : f32 to vector<1x32x100xf32>
    %6 = arith.mulf %4, %5 : vector<1x32x100xf32>
    %7 = math.exp %6 : vector<1x32x100xf32>
    %8 = arith.negf %2 : vector<1x32x100xf32>
    %9 = math.exp %8 : vector<1x32x100xf32>
    %cst_3 = arith.constant 1.000000e+00 : f32
    %10 = vector.broadcast %cst_3 : f32 to vector<1x32x100xf32>
    %11 = arith.addf %10, %9 : vector<1x32x100xf32>
    %12 = arith.divf %10, %11 : vector<1x32x100xf32>
    %13 = vector.broadcast %1 : f32 to vector<1x32x100xf32>
    %14 = arith.mulf %13, %7 : vector<1x32x100xf32>
    %15 = arith.mulf %14, %12 : vector<1x32x100xf32>
    %c0_4 = arith.constant 0 : index
    %c0_5 = arith.constant 0 : index
    %c0_6 = arith.constant 0 : index
    %16 = vector.load %arg4[%c0_4, %c0_5, %c0_6] : memref<1x32x100xf32, #tpu.memory_space<vmem>>, vector<1x32x100xf32>
    tpu.vector_store %arg4[%c0_4, %c0_5, %c0_6], %15 {strides = array<i32>} : memref<1x32x100xf32, #tpu.memory_space<vmem>>, vector<1x32x100xf32>,
    return
  }
  func.func @transform_0(%arg0: i32, %arg1: i32) -> i32 {
    %c0_i32 = arith.constant 0 : i32
    %c0_i32_0 = arith.constant 0 : i32
    return %c0_i32 : i32
  }
  func.func @transform_1(%arg0: i32, %arg1: i32) -> (i32, i32, i32) {
    %c0_i32 = arith.constant 0 : i32
    %c0_i32_0 = arith.constant 0 : i32
    return %arg0, %arg1, %c0_i32 : i32, i32, i32
  }
  func.func @transform_2(%arg0: i32, %arg1: i32) -> (i32, i32, i32) {
    %c0_i32 = arith.constant 0 : i32
    %c0_i32_0 = arith.constant 0 : i32
    return %arg0, %arg1, %c0_i32 : i32, i32, i32
  }
}

</mosaic_0001>

<llo_original>
// kernel: tpu_custom_call.1
$region0: #{tpu_custom_call.1}
  #allocation0 [shape = 'u32[]', space=smem, size = 0x4, offset = 0x4, fixed_abs, tag = 'smem constant byte address 0x4 - core index']
  #allocation1 [shape = 'u32[144,128]{1,0:T(1,128)}', space=vmem, size = 0x12000, scoped, tag = 'internal scratch']
  %s0 = inlined_call_operand.vmem [shape: f32[2], index: 0, kind: input, shape index: {}]
  %s1 = inlined_call_operand.vmem [shape: f32[2,127,100], index: 1, kind: input, shape index: {}]
  %s2 = inlined_call_operand.vmem [shape: f32[2,127,100], index: 2, kind: output, shape index: {}]
  %s3 = sld [smem:[#allocation0]]
  $region45: #{tpu_custom_call.1} parent=0
    _
  %s5 = ssub.s32 1, %s3
  %s6 = scalar_select 0, %s5, %s3
  $region1: #{tpu_custom_call.1} parent=0
    #allocation2 [shape = 'u8[512]{0}', space=smem, size = 0x200, scoped, tag = 'input window, operand 0, single buffered']
    #allocation3 [shape = 's32[2]{0}', space=sflag, size = 0x8, scoped, tag = 'scoped memory for tpu_custom_call.1']
    %7 = vsyncpa [#allocation3], 0
    loop: start=0, step=1, limit=10
    $region2: #{tpu_custom_call.1} parent=1 // loop_pre_header
      _
    $region3: #{tpu_custom_call.1} parent=1 // loop_header
      %s9 = sphi 0, %s13
      %p10 = scmp.ge.s32.totalorder %s9, 10
      %s16 = sphi 0, %s28
      %s17 = sphi 0, %s24
      %s18 = sphi 0, %s16
      %s19 = sphi 0, %s17
      %s20 = sphi 0, %s18
      %s21 = sphi 0, %s19
      %s29 = sphi 0, %s29
      %s31 = sphi 0, %s29
      %s32 = sphi 0, %s31
      %s46 = sphi 0, %s32
      %s54 = sphi 0, %s56
      %s57 = sphi 0, %s54
      %s58 = sphi 0, %s57
      %s74 = sphi 0, %s58
      %s82 = sphi 0, %s84
      %s85 = sphi 0, %s82
      %s86 = sphi 0, %s85
      %s102 = sphi 0, %s86
    $region4: #{tpu_custom_call.1} parent=1 // loop_header_branch
      %12 = sbr.rel (%p10) target = $region8
    $region5: #{tpu_custom_call.1} parent=1 // loop_body
      %s14 = ssub.s32 %s9, 1
      %s15 = ssub.s32 %s9, 2
      %s22 = sadd.s32 1, %s17
      %p23 = scmp.ge.s32.totalorder %s22, 4
      %s24 = scalar_select %p23, 0, %s22
      %s25 = sadd.s32 1, %s16
      %s26 = scalar_select %p23, %s25, %s16
      %p27 = scmp.ge.s32.totalorder %s26, 2
      %s28 = scalar_select %p27, 0, %s26
      %s30 = sadd.s32 %s29, 1
      %p33 = scmp.eq.s32.totalorder %s9, 7
      %p34 = scmp.ne.s32.totalorder %s29, %s31
      %p35 = scmp.eq.s32.totalorder %s9, 0
      %p36 = por %p34, %p35
      %p37 = scmp.ne.s32.totalorder %s29, %s31
      %p38 = scmp.eq.s32.totalorder %s14, 7
      %p39 = por %p37, %p38
      %p40 = scmp.ne.s32.totalorder %s31, %s32
      %p41 = scmp.eq.s32.totalorder %s14, 0
      %p42 = por %p40, %p41
      %p43 = scmp.ne.s32.totalorder %s31, %s32
      %p44 = scmp.eq.s32.totalorder %s15, 7
      %p45 = por %p43, %p44
      %p47 = scmp.ne.s32.totalorder %s32, %s46
      %p48 = scmp.eq.s32.totalorder %s15, 0
      %p49 = por %p47, %p48
      %s50 = ssub.s32 %s16, %s28
      %s51 = ssub.s32 %s17, %s24
      %s52 = sor.u32 %s50, %s51
      %p53 = scmp.eq.s32.totalorder %s52, 0
      %s55 = sadd.s32 %s54, 1
      %s56 = scalar_select %p53, %s54, %s55
      %p59 = pneg %p53
      %p60 = scmp.eq.s32.totalorder %s9, 7
      %p61 = por %p59, %p60
      %p62 = scmp.ne.s32.totalorder %s54, %s57
      %p63 = scmp.eq.s32.totalorder %s9, 0
      %p64 = por %p62, %p63
      %p65 = scmp.ne.s32.totalorder %s54, %s57
      %p66 = scmp.eq.s32.totalorder %s14, 7
      %p67 = por %p65, %p66
      %p68 = scmp.ne.s32.totalorder %s57, %s58
      %p69 = scmp.eq.s32.totalorder %s14, 0
      %p70 = por %p68, %p69
      %p71 = scmp.ne.s32.totalorder %s57, %s58
      %p72 = scmp.eq.s32.totalorder %s15, 7
      %p73 = por %p71, %p72
      %p75 = scmp.ne.s32.totalorder %s58, %s74
      %p76 = scmp.eq.s32.totalorder %s15, 0
      %p77 = por %p75, %p76
      %s78 = ssub.s32 %s16, %s28
      %s79 = ssub.s32 %s17, %s24
      %s80 = sor.u32 %s78, %s79
      %p81 = scmp.eq.s32.totalorder %s80, 0
      %s83 = sadd.s32 %s82, 1
      %s84 = scalar_select %p81, %s82, %s83
      %p87 = pneg %p81
      %p88 = scmp.eq.s32.totalorder %s9, 7
      %p89 = por %p87, %p88
      %p90 = scmp.ne.s32.totalorder %s82, %s85
      %p91 = scmp.eq.s32.totalorder %s9, 0
      %p92 = por %p90, %p91
      %p93 = scmp.ne.s32.totalorder %s82, %s85
      %p94 = scmp.eq.s32.totalorder %s14, 7
      %p95 = por %p93, %p94
      %p96 = scmp.ne.s32.totalorder %s85, %s86
      %p97 = scmp.eq.s32.totalorder %s14, 0
      %p98 = por %p96, %p97
      %p99 = scmp.ne.s32.totalorder %s85, %s86
      %p100 = scmp.eq.s32.totalorder %s15, 7
      %p101 = por %p99, %p100
      %p103 = scmp.ne.s32.totalorder %s86, %s102
      %p104 = scmp.eq.s32.totalorder %s15, 0
      %p105 = por %p103, %p104
      %p106 = scmp.le.s32.totalorder 1, %s9
      %p107 = scmp.lt.s32.totalorder %s9, 9
      %p108 = pnand %p106, %p107
      %p109 = pneg %p108
      // Predicated region
      $region9: #{tpu_custom_call.1} parent=5 // pred_check
        _
      $region10: #{tpu_custom_call.1} parent=5 // pred_check_branch
        %111 = sbr.rel (%p108) target = $region12
      $region11: #{tpu_custom_call.1} parent=5 // pred_region
        %s112 = ssub.s32 %s9, 1
        // Predicated region
        $region13: #{tpu_custom_call.1} parent=11 // pred_check
          %p113 = pneg %p42
        $region14: #{tpu_custom_call.1} parent=11 // pred_check_branch
          %115 = sbr.rel (%p113) target = $region16
        $region15: #{tpu_custom_call.1} parent=11 // pred_region
          %s117 = ssub.s32 16, 16
          %118 = vsyncadd [#allocation3], %s117
          %s120 = sshll.u32 %s0, 4
          %s121 = int_to_ptr.vmem [resolvable:$true] %s120
          %123 = dma.vmem_to_smem %s121, 16, [#allocation2], [#allocation3]
        $region16: #{tpu_custom_call.1} parent=11 // pred_fallthru
          _
      $region12: #{tpu_custom_call.1} parent=5 // pred_fallthru
        _
      %p124 = scmp.lt.s32.totalorder %s9, 8
      // Predicated region
      $region17: #{tpu_custom_call.1} parent=5 // pred_check
        %p125 = pneg %p124
      $region18: #{tpu_custom_call.1} parent=5 // pred_check_branch
        %127 = sbr.rel (%p125) target = $region20
      $region19: #{tpu_custom_call.1} parent=5 // pred_region
        // Predicated region
        $region21: #{tpu_custom_call.1} parent=19 // pred_check
          %p128 = pneg %p64
        $region22: #{tpu_custom_call.1} parent=19 // pred_check_branch
          %130 = sbr.rel (%p128) target = $region24
        $region23: #{tpu_custom_call.1} parent=19 // pred_region
          %s131 = smul.u32 4, %s17
          %p132 = scmp.lt.s32.totalorder %s16, 1
          %s133 = scalar_select %p132, %s16, 1
          %p134 = scmp.lt.s32.totalorder %s131, 15
          %s135 = scalar_select %p134, %s131, 15
          %s136 = smul.addr %s133, 16
          %s137 = sadd.s32 %s135, %s136
          %s138 = smul.addr %s137, 8
          %s139 = scalar_lea.vmem %s1, %s138
          %s140 = smul.u32 4, %s17
        $region24: #{tpu_custom_call.1} parent=19 // pred_fallthru
          _
      $region20: #{tpu_custom_call.1} parent=5 // pred_fallthru
        _
      %p141 = scmp.le.s32.totalorder 1, %s9
      %p142 = scmp.lt.s32.totalorder %s9, 9
      %p143 = pnand %p141, %p142
      %p144 = pneg %p143
      // Predicated region
      $region25: #{tpu_custom_call.1} parent=5 // pred_check
        _
      $region26: #{tpu_custom_call.1} parent=5 // pred_check_branch
        %146 = sbr.rel (%p143) target = $region28
      $region27: #{tpu_custom_call.1} parent=5 // pred_region
        %s147 = ssub.s32 %s9, 1
        // Predicated region
        $region29: #{tpu_custom_call.1} parent=27 // pred_check
          %p148 = pneg %p42
        $region30: #{tpu_custom_call.1} parent=27 // pred_check_branch
          %150 = sbr.rel (%p148) target = $region32
        $region31: #{tpu_custom_call.1} parent=27 // pred_region
          %151 = dma.done [#allocation3], 16
        $region32: #{tpu_custom_call.1} parent=27 // pred_fallthru
          _
        %152 = sfence
        %p153 = pneg %p42
        %p154 = pneg %p39
        %s155 = smul.u32 4, %s19
        %p156 = scmp.lt.s32.totalorder %s18, 1
        %s157 = scalar_select %p156, %s18, 1
        %p158 = scmp.lt.s32.totalorder %s155, 15
        %s159 = scalar_select %p158, %s155, 15
        %s160 = smul.addr %s157, 16
        %s161 = sadd.s32 %s159, %s160
        %s162 = smul.addr %s161, 8
        %s163 = scalar_lea.vmem %s1, %s162
        %p164 = pneg %p70
        %p165 = pneg %p67
        %p166 = pneg %p98
        %p167 = pneg %p95
        %s168 = smul.u32 4, %s19
        %p169 = scmp.lt.s32.totalorder %s18, 1
        %s170 = scalar_select %p169, %s18, 1
        %p171 = scmp.lt.s32.totalorder %s168, 15
        %s172 = scalar_select %p171, %s168, 15
        %s173 = smul.addr %s170, 16
        %s174 = sadd.s32 %s172, %s173
        %s175 = smul.addr %s174, 8
        %s176 = scalar_lea.vmem %s2, %s175
        %s177 = smul.u32 4, %s19
        %p178 = scmp.lt.s32.totalorder %s18, 1
        %s179 = scalar_select %p178, %s18, 1
        %p180 = scmp.lt.s32.totalorder %s177, 15
        %s181 = scalar_select %p180, %s177, 15
        %s182 = smul.addr %s179, 16
        %s183 = sadd.s32 %s181, %s182
        %s184 = smul.addr %s183, 8
        %s185 = scalar_lea.vmem %s1, %s184
        %s186 = smul.u32 4, %s19
        %s187 = smul.u32 4, %s19
        %p188 = scmp.lt.s32.totalorder %s18, 1
        %s189 = scalar_select %p188, %s18, 1
        %p190 = scmp.lt.s32.totalorder %s187, 15
        %s191 = scalar_select %p190, %s187, 15
        %s192 = smul.addr %s189, 16
        %s193 = sadd.s32 %s191, %s192
        %s194 = smul.addr %s193, 8
        %s195 = scalar_lea.vmem %s2, %s194
        %s196 = smul.u32 4, %s19
        %s197 = sld [smem:[#allocation2]]
        %s198 = sld [smem:[#allocation2 + $0x1]]
        %v199 = vld [vmem:[%s185] sm:$0xff]
        %v200 = vld [vmem:[%s185 + $0x8] sm:$0xff]
        %v201 = vld [vmem:[%s185 + $0x10] sm:$0xff]
        %v202 = vld [vmem:[%s185 + $0x18] sm:$0xff]
        %v203 = vsub.f32 0.0, %v199
        %v204 = vsub.f32 0.0, %v200
        %v205 = vsub.f32 0.0, %v201
        %v206 = vsub.f32 0.0, %v202
        %v207 = vstv %s197
        %v208 = vmul.f32 %v203, %v207
        %v209 = vmul.f32 %v204, %v207
        %v210 = vmul.f32 %v205, %v207
        %v211 = vmul.f32 %v206, %v207
        %v212 = vmul.f32 %v208, 1.442695
        %v213 = vpow.pop %v212
        %v214 = vmul.f32 %v209, 1.442695
        %v215 = vpow.pop %v214
        %v216 = vmul.f32 %v210, 1.442695
        %v217 = vpow.pop %v216
        %v218 = vmul.f32 %v211, 1.442695
        %v219 = vpow.pop %v218
        %v220 = vxor.u32 %v199, 2147483648
        %v221 = vxor.u32 %v200, 2147483648
        %v222 = vxor.u32 %v201, 2147483648
        %v223 = vxor.u32 %v202, 2147483648
        %v224 = vmul.f32 %v220, 1.442695
        %v225 = vpow.pop %v224
        %v226 = vmul.f32 %v221, 1.442695
        %v227 = vpow.pop %v226
        %v228 = vmul.f32 %v222, 1.442695
        %v229 = vpow.pop %v228
        %v230 = vmul.f32 %v223, 1.442695
        %v231 = vpow.pop %v230
        %v232 = vadd.f32 %v225, 1.0
        %v233 = vadd.f32 %v227, 1.0
        %v234 = vadd.f32 %v229, 1.0
        %v235 = vadd.f32 %v231, 1.0
        %v236 = vrcp.pop %v232
        %v237 = vmul.f32 1.0, %v236
        %v238 = vrcp.pop %v233
        %v239 = vmul.f32 1.0, %v238
        %v240 = vrcp.pop %v234
        %v241 = vmul.f32 1.0, %v240
        %v242 = vrcp.pop %v235
        %v243 = vmul.f32 1.0, %v242
        %v244 = vstv %s198
        %v245 = vmul.f32 %v244, %v213
        %v246 = vmul.f32 %v244, %v215
        %v247 = vmul.f32 %v244, %v217
        %v248 = vmul.f32 %v244, %v219
        %v249 = vmul.f32 %v245, %v237
        %v250 = vmul.f32 %v246, %v239
        %v251 = vmul.f32 %v247, %v241
        %v252 = vmul.f32 %v248, %v243
        %vm253 = vcmask 818176
        %254 = vst.msk [vmem:[%s195] sm:$0xff] %vm253, %v249
        %255 = vst.msk [vmem:[%s195 + $0x8] sm:$0xff] %vm253, %v250
        %256 = vst.msk [vmem:[%s195 + $0x10] sm:$0xff] %vm253, %v251
        %257 = vst.msk [vmem:[%s195 + $0x18] sm:$0xff] %vm253, %v252
        %s258 = smul.u32 4, %s19
        %p259 = scmp.lt.s32.totalorder %s18, 1
        %s260 = scalar_select %p259, %s18, 1
        %p261 = scmp.lt.s32.totalorder %s258, 15
        %s262 = scalar_select %p261, %s258, 15
        %s263 = smul.addr %s260, 16
        %s264 = sadd.s32 %s262, %s263
        %s265 = smul.addr %s264, 8
        %s266 = scalar_lea.vmem %s2, %s265
        // Predicated region
        $region33: #{tpu_custom_call.1} parent=27 // pred_check
          %p267 = pneg %p95
        $region34: #{tpu_custom_call.1} parent=27 // pred_check_branch
          %269 = sbr.rel (%p267) target = $region36
        $region35: #{tpu_custom_call.1} parent=27 // pred_region
          %s270 = smul.u32 4, %s19
        $region36: #{tpu_custom_call.1} parent=27 // pred_fallthru
          _
      $region28: #{tpu_custom_call.1} parent=5 // pred_fallthru
        _
      %p271 = scmp.le.s32.totalorder 2, %s9
      // Predicated region
      $region37: #{tpu_custom_call.1} parent=5 // pred_check
        %p272 = pneg %p271
      $region38: #{tpu_custom_call.1} parent=5 // pred_check_branch
        %274 = sbr.rel (%p272) target = $region40
      $region39: #{tpu_custom_call.1} parent=5 // pred_region
        %s275 = ssub.s32 %s9, 2
        // Predicated region
        $region41: #{tpu_custom_call.1} parent=39 // pred_check
          %p276 = pneg %p101
        $region42: #{tpu_custom_call.1} parent=39 // pred_check_branch
          %278 = sbr.rel (%p276) target = $region44
        $region43: #{tpu_custom_call.1} parent=39 // pred_region
          %s279 = smul.u32 4, %s21
          %p280 = scmp.lt.s32.totalorder %s20, 1
          %s281 = scalar_select %p280, %s20, 1
          %p282 = scmp.lt.s32.totalorder %s279, 15
          %s283 = scalar_select %p282, %s279, 15
          %s284 = smul.addr %s281, 16
          %s285 = sadd.s32 %s283, %s284
          %s286 = smul.addr %s285, 8
          %s287 = scalar_lea.vmem %s2, %s286
        $region44: #{tpu_custom_call.1} parent=39 // pred_fallthru
          _
      $region40: #{tpu_custom_call.1} parent=5 // pred_fallthru
        _
    $region6: #{tpu_custom_call.1} parent=1 // loop_footer
      %s13 = sadd.s32 1, %s9
    $region7: #{tpu_custom_call.1} parent=1 // loop_footer_branch
      %8 = sbr.rel target = $region3
    $region8: #{tpu_custom_call.1} parent=1 // loop_exit
      _
    %288 = vsyncpa [#allocation3], 1
    %s289 = scalar_lea.sflag [#allocation3], 1
    %290 = vsyncpa %s289, 1

</llo_original>
